<compile_context>
chip_gen: v7x
topology: tpu7x:2x2x1
jax: 0.10.0
libtpu: 0.0.40
codegen_flags: <defaults>
</compile_context>

<pallas_src>
import functools
import math

import jax
import jax.numpy as jnp
from jax.experimental import pallas as pl
from jax.experimental.pallas import tpu as pltpu


def _round_up(x, m):
    return ((x + m - 1) // m) * m


def _apply_activation(x, activation):
    if activation == "sigmoid":
        return jax.nn.sigmoid(x)           # lax.logistic -> EUP slot
    if activation == "tanh":
        return jnp.tanh(x)
    if activation == "relu":
        return jnp.maximum(x, 0.0)
    return x                                # identity


def lstm_gate_kernel(w_ref, u_ref, x_ref, h_ref, b_ref, o_ref, acc_ref, *,
                     activation):
    """Fused tile: out = act(W @ x + U @ hidden + bias), K-tiled accumulation."""
    k = pl.program_id(2)

    @pl.when(k == 0)
    def _():
        acc_ref[...] = jnp.zeros_like(acc_ref)

    acc_ref[...] += jnp.dot(w_ref[...], x_ref[...],
                            preferred_element_type=jnp.float32)
    acc_ref[...] += jnp.dot(u_ref[...], h_ref[...],
                            preferred_element_type=jnp.float32)

    @pl.when(k == pl.num_programs(2) - 1)
    def _():
        pre = acc_ref[...] + b_ref[...].astype(jnp.float32)
        o_ref[...] = _apply_activation(pre, activation).astype(o_ref.dtype)


def _maybe_pad2d(a, target_shape):
    if a.shape == target_shape:
        return a
    pad = [(0, t - s) for s, t in zip(a.shape, target_shape)]
    return jnp.pad(a, pad)


def mat_lstm_gate_forward(W, U, bias, x, hidden, *, activation="sigmoid",
                          use_bf16_matmul=True, out_dtype=None):
    rows, cols = bias.shape
    assert W.shape == (rows, rows) and U.shape == (rows, rows)
    assert x.shape == (rows, cols) and hidden.shape == (rows, cols)

    if out_dtype is None:
        out_dtype = x.dtype
    mat_dtype = jnp.bfloat16 if use_bf16_matmul else jnp.float32

    # Cast only when needed. For production, keep W/U stored persistently in
    # bf16 so these casts disappear entirely.
    def _cast(a):
        return a if a.dtype == mat_dtype else a.astype(mat_dtype)

    Wc, Uc, xc, hc = _cast(W), _cast(U), _cast(x), _cast(hidden)

    # ---- tile selection (MXU-shaped, (8,128)-legal after padding) ----------
    tile_m = min(256, _round_up(rows, 8))      # output row tile (sublane axis)
    tile_n = min(512, _round_up(cols, 128))    # output col tile (lane axis)
    tile_k = min(512, _round_up(rows, 128))    # contraction tile

    m_pad = _round_up(rows, tile_m)
    n_pad = _round_up(cols, tile_n)
    k_pad = _round_up(rows, tile_k)

    Wp = _maybe_pad2d(Wc, (m_pad, k_pad))
    Up = _maybe_pad2d(Uc, (m_pad, k_pad))
    xp = _maybe_pad2d(xc, (k_pad, n_pad))
    hp = _maybe_pad2d(hc, (k_pad, n_pad))
    bp = _maybe_pad2d(bias, (m_pad, n_pad))

    gm, gn, gk = m_pad // tile_m, n_pad // tile_n, k_pad // tile_k
    grid = (gm, gn, gk)

    # ---- VMEM budget: derived from real (double-buffered) tile footprint ---
    mat_isz = jnp.dtype(mat_dtype).itemsize
    b_isz = jnp.dtype(bp.dtype).itemsize
    o_isz = jnp.dtype(out_dtype).itemsize
    need = (
        2 * (2 * tile_m * tile_k * mat_isz        # W, U tiles (double-buffered)
              + 2 * tile_k * tile_n * mat_isz     # x, h tiles
              + tile_m * tile_n * b_isz)          # bias tile
        + 2 * tile_m * tile_n * o_isz             # out tile
        + tile_m * tile_n * 4                     # f32 accumulator scratch
    )
    vmem_limit = int(min(max(2 * need, 16 << 20), 48 << 20))

    # ---- advisory cost estimate (includes grid revisits) --------------------
    flops = 2 * 2 * m_pad * k_pad * n_pad + 2 * m_pad * n_pad
    transcendentals = m_pad * n_pad if activation in ("sigmoid", "tanh") else 0
    bytes_accessed = (
        gn * 2 * m_pad * k_pad * mat_isz          # W, U re-read per N tile
        + gm * 2 * k_pad * n_pad * mat_isz        # x, h re-read per M tile
        + m_pad * n_pad * b_isz                   # bias
        + m_pad * n_pad * o_isz                   # output
    )

    kernel = functools.partial(lstm_gate_kernel, activation=activation)

    out_padded = pl.pallas_call(
        kernel,
        out_shape=jax.ShapeDtypeStruct((m_pad, n_pad), out_dtype),
        grid_spec=pltpu.PrefetchScalarGridSpec(
            num_scalar_prefetch=0,
            grid=grid,
            in_specs=[
                pl.BlockSpec((tile_m, tile_k), lambda i, j, k: (i, k)),  # W
                pl.BlockSpec((tile_m, tile_k), lambda i, j, k: (i, k)),  # U
                pl.BlockSpec((tile_k, tile_n), lambda i, j, k: (k, j)),  # x
                pl.BlockSpec((tile_k, tile_n), lambda i, j, k: (k, j)),  # h
                pl.BlockSpec((tile_m, tile_n), lambda i, j, k: (i, j)),  # bias
            ],
            out_specs=pl.BlockSpec((tile_m, tile_n), lambda i, j, k: (i, j)),
            scratch_shapes=[pltpu.VMEM((tile_m, tile_n), jnp.float32)],
        ),
        compiler_params=pltpu.CompilerParams(
            dimension_semantics=("parallel", "parallel", "arbitrary"),
            vmem_limit_bytes=vmem_limit,
        ),
        cost_estimate=pl.CostEstimate(
            flops=flops,
            transcendentals=transcendentals,
            bytes_accessed=bytes_accessed,
        ),
    )(Wp, Up, xp, hp, bp)

    if (m_pad, n_pad) != (rows, cols):
        return out_padded[:rows, :cols]
    return out_padded


# ------------------------- pure-JAX reference -------------------------
def mat_lstm_gate_ref(W, U, bias, x, hidden, activation="sigmoid"):
    pre = W @ x + U @ hidden + bias
    return _apply_activation(pre, activation)


if __name__ == "__main__":
    rows, cols = 32, 16  # small shapes consistent with the module (rows, cols)
    key = jax.random.PRNGKey(0)
    k_w, k_u, k_x, k_h, k_b = jax.random.split(key, 5)

    # reset_param: uniform(-stdv, stdv) with stdv = 1/sqrt(rows)
    stdv = 1.0 / math.sqrt(rows)
    W = jax.random.uniform(k_w, (rows, rows), jnp.float32, -stdv, stdv)
    U = jax.random.uniform(k_u, (rows, rows), jnp.float32, -stdv, stdv)
    # bias is a (rows, cols) parameter (zeros at init); small random values so
    # the bias-add path is exercised.
    bias = 0.1 * jax.random.normal(k_b, (rows, cols), jnp.float32)
    x = jax.random.normal(k_x, (rows, cols), jnp.float32)
    hidden = jax.random.normal(k_h, (rows, cols), jnp.float32)

    out = mat_lstm_gate_forward(W, U, bias, x, hidden, activation="sigmoid")
    out = jax.block_until_ready(out)

    ref = mat_lstm_gate_ref(W, U, bias, x, hidden, "sigmoid")
    assert out.shape == (rows, cols), out.shape
    max_err = float(jnp.max(jnp.abs(out.astype(jnp.float32) - ref)))
    # bf16 MXU operands + f32 accumulation: errors well inside 2e-2 after the
    # saturating sigmoid.
    assert max_err < 2e-2, f"max_err={max_err}"
    print("KERNEL_OK")
</pallas_src>

<mosaic_0001>
module attributes {stable_mosaic.version = 11 : i64} {
  func.func @lstm_gate_kernel(%arg0: i32, %arg1: i32, %arg2: i32, %arg3: memref<32x128xbf16, #tpu.memory_space<vmem>>, %arg4: memref<32x128xbf16, #tpu.memory_space<vmem>>, %arg5: memref<128x128xbf16, #tpu.memory_space<vmem>>, %arg6: memref<128x128xbf16, #tpu.memory_space<vmem>>, %arg7: memref<32x128xf32, #tpu.memory_space<vmem>>, %arg8: memref<32x128xf32, #tpu.memory_space<vmem>>, %arg9: memref<32x128xf32, #tpu.memory_space<vmem>>) attributes {dimension_semantics = [#tpu.dimension_semantics<parallel>, #tpu.dimension_semantics<parallel>, #tpu.dimension_semantics<arbitrary>], iteration_bounds = array<i64: 1, 1, 1>, scalar_prefetch = 0 : i64, scratch_operands = 1 : i64, tpu.core_type = #tpu.core_type<tc>, window_params = [{transform_indices = @transform_0, window_bounds = array<i64: 32, 128>}, {transform_indices = @transform_1, window_bounds = array<i64: 32, 128>}, {transform_indices = @transform_2, window_bounds = array<i64: 128, 128>}, {transform_indices = @transform_3, window_bounds = array<i64: 128, 128>}, {transform_indices = @transform_4, window_bounds = array<i64: 32, 128>}, {transform_indices = @transform_5, window_bounds = array<i64: 32, 128>}]} {
    %c0_i32 = arith.constant 0 : i32
    %0 = arith.cmpi eq, %arg2, %c0_i32 : i32
    %1 = arith.extui %0 : i1 to i32
    %c0_i32_0 = arith.constant 0 : i32
    %2 = arith.cmpi ne, %1, %c0_i32_0 : i32
    scf.if %2 {
      %cst_19 = arith.constant 0.000000e+00 : f32
      %18 = vector.broadcast %cst_19 : f32 to vector<32x128xf32>
      %c0_20 = arith.constant 0 : index
      %c0_21 = arith.constant 0 : index
      %19 = vector.load %arg9[%c0_20, %c0_21] : memref<32x128xf32, #tpu.memory_space<vmem>>, vector<32x128xf32>
      tpu.vector_store %arg9[%c0_20, %c0_21], %18 {strides = array<i32>} : memref<32x128xf32, #tpu.memory_space<vmem>>, vector<32x128xf32>,
    } else {
    }
    %c0 = arith.constant 0 : index
    %c0_1 = arith.constant 0 : index
    %3 = vector.load %arg9[%c0, %c0_1] : memref<32x128xf32, #tpu.memory_space<vmem>>, vector<32x128xf32>
    %c0_2 = arith.constant 0 : index
    %c0_3 = arith.constant 0 : index
    %4 = vector.load %arg3[%c0_2, %c0_3] : memref<32x128xbf16, #tpu.memory_space<vmem>>, vector<32x128xbf16>
    %c0_4 = arith.constant 0 : index
    %c0_5 = arith.constant 0 : index
    %5 = vector.load %arg5[%c0_4, %c0_5] : memref<128x128xbf16, #tpu.memory_space<vmem>>, vector<128x128xbf16>
    %cst = arith.constant dense<0.000000e+00> : vector<32x128xf32>
    %6 = tpu.matmul %4, %5, %cst {dimension_numbers = #tpu.dot_dimension_numbers<[1], [0], [0], [1], [0, 0, 1, 1], [], []>} : vector<32x128xbf16>, vector<128x128xbf16>, vector<32x128xf32> -> vector<32x128xf32>
    %7 = arith.addf %3, %6 : vector<32x128xf32>
    %c0_6 = arith.constant 0 : index
    %c0_7 = arith.constant 0 : index
    %8 = vector.load %arg9[%c0_6, %c0_7] : memref<32x128xf32, #tpu.memory_space<vmem>>, vector<32x128xf32>
    tpu.vector_store %arg9[%c0_6, %c0_7], %7 {strides = array<i32>} : memref<32x128xf32, #tpu.memory_space<vmem>>, vector<32x128xf32>,
    %c0_8 = arith.constant 0 : index
    %c0_9 = arith.constant 0 : index
    %9 = vector.load %arg9[%c0_8, %c0_9] : memref<32x128xf32, #tpu.memory_space<vmem>>, vector<32x128xf32>
    %c0_10 = arith.constant 0 : index
    %c0_11 = arith.constant 0 : index
    %10 = vector.load %arg4[%c0_10, %c0_11] : memref<32x128xbf16, #tpu.memory_space<vmem>>, vector<32x128xbf16>
    %c0_12 = arith.constant 0 : index
    %c0_13 = arith.constant 0 : index
    %11 = vector.load %arg6[%c0_12, %c0_13] : memref<128x128xbf16, #tpu.memory_space<vmem>>, vector<128x128xbf16>
    %cst_14 = arith.constant dense<0.000000e+00> : vector<32x128xf32>
    %12 = tpu.matmul %10, %11, %cst_14 {dimension_numbers = #tpu.dot_dimension_numbers<[1], [0], [0], [1], [0, 0, 1, 1], [], []>} : vector<32x128xbf16>, vector<128x128xbf16>, vector<32x128xf32> -> vector<32x128xf32>
    %13 = arith.addf %9, %12 : vector<32x128xf32>
    %c0_15 = arith.constant 0 : index
    %c0_16 = arith.constant 0 : index
    %14 = vector.load %arg9[%c0_15, %c0_16] : memref<32x128xf32, #tpu.memory_space<vmem>>, vector<32x128xf32>
    tpu.vector_store %arg9[%c0_15, %c0_16], %13 {strides = array<i32>} : memref<32x128xf32, #tpu.memory_space<vmem>>, vector<32x128xf32>,
    %c0_i32_17 = arith.constant 0 : i32
    %15 = arith.cmpi eq, %arg2, %c0_i32_17 : i32
    %16 = arith.extui %15 : i1 to i32
    %c0_i32_18 = arith.constant 0 : i32
    %17 = arith.cmpi ne, %16, %c0_i32_18 : i32
    scf.if %17 {
      %c0_19 = arith.constant 0 : index
      %c0_20 = arith.constant 0 : index
      %18 = vector.load %arg9[%c0_19, %c0_20] : memref<32x128xf32, #tpu.memory_space<vmem>>, vector<32x128xf32>
      %c0_21 = arith.constant 0 : index
      %c0_22 = arith.constant 0 : index
      %19 = vector.load %arg7[%c0_21, %c0_22] : memref<32x128xf32, #tpu.memory_space<vmem>>, vector<32x128xf32>
      %20 = arith.addf %18, %19 : vector<32x128xf32>
      %21 = arith.negf %20 : vector<32x128xf32>
      %22 = math.exp %21 : vector<32x128xf32>
      %cst_23 = arith.constant 1.000000e+00 : f32
      %23 = vector.broadcast %cst_23 : f32 to vector<32x128xf32>
      %24 = arith.addf %23, %22 : vector<32x128xf32>
      %25 = arith.divf %23, %24 : vector<32x128xf32>
      %c0_24 = arith.constant 0 : index
      %c0_25 = arith.constant 0 : index
      %26 = vector.load %arg8[%c0_24, %c0_25] : memref<32x128xf32, #tpu.memory_space<vmem>>, vector<32x128xf32>
      tpu.vector_store %arg8[%c0_24, %c0_25], %25 {strides = array<i32>} : memref<32x128xf32, #tpu.memory_space<vmem>>, vector<32x128xf32>,
    } else {
    }
    return
  }
  func.func @transform_0(%arg0: i32, %arg1: i32, %arg2: i32) -> (i32, i32) {
    %c0_i32 = arith.constant 0 : i32
    return %arg0, %arg2 : i32, i32
  }
  func.func @transform_1(%arg0: i32, %arg1: i32, %arg2: i32) -> (i32, i32) {
    %c0_i32 = arith.constant 0 : i32
    return %arg0, %arg2 : i32, i32
  }
  func.func @transform_2(%arg0: i32, %arg1: i32, %arg2: i32) -> (i32, i32) {
    %c0_i32 = arith.constant 0 : i32
    return %arg2, %arg1 : i32, i32
  }
  func.func @transform_3(%arg0: i32, %arg1: i32, %arg2: i32) -> (i32, i32) {
    %c0_i32 = arith.constant 0 : i32
    return %arg2, %arg1 : i32, i32
  }
  func.func @transform_4(%arg0: i32, %arg1: i32, %arg2: i32) -> (i32, i32) {
    %c0_i32 = arith.constant 0 : i32
    return %arg0, %arg1 : i32, i32
  }
  func.func @transform_5(%arg0: i32, %arg1: i32, %arg2: i32) -> (i32, i32) {
    %c0_i32 = arith.constant 0 : i32
    return %arg0, %arg1 : i32, i32
  }
}

</mosaic_0001>

<llo_original>
// kernel: tpu_custom_call.1
$region0: #{tpu_custom_call.1}
  #allocation0 [shape = 'u32[]', space=smem, size = 0x4, offset = 0x4, fixed_abs, tag = 'smem constant byte address 0x4 - core index']
  #allocation1 [shape = 'u32[144,128]{1,0:T(1,128)}', space=vmem, size = 0x12000, scoped, tag = 'internal scratch']
  #allocation2 [shape = 'f32[32,128]{1,0:T(8,128)}', space=vmem, size = 0x4000, scoped, tag = 'scratch operand']
  %s0 = inlined_call_operand.hbm [shape: bf16[32,128], index: 0, kind: input, shape index: {}]
  %s1 = inlined_call_operand.hbm [shape: bf16[32,128], index: 1, kind: input, shape index: {}]
  %s2 = inlined_call_operand.hbm [shape: bf16[128,128], index: 2, kind: input, shape index: {}]
  %s3 = inlined_call_operand.hbm [shape: bf16[128,128], index: 3, kind: input, shape index: {}]
  %s4 = inlined_call_operand.hbm [shape: f32[32,128], index: 4, kind: input, shape index: {}]
  %s5 = inlined_call_operand.hbm [shape: f32[32,128], index: 5, kind: output, shape index: {}]
  %s6 = sld [smem:[#allocation0]]
  $region58: #{tpu_custom_call.1} parent=0
    _
  %s8 = ssub.s32 1, %s6
  %s9 = scalar_select 0, %s8, %s6
  $region1: #{tpu_custom_call.1} parent=0
    #allocation3 [shape = 'u8[8192]{0}', space=vmem, size = 0x2000, scoped, tag = 'input window, operand 0, single buffered']
    #allocation4 [shape = 's32[1]{0}', space=sflag, size = 0x4, scoped, tag = 'scoped memory for tpu_custom_call.1']
    #allocation5 [shape = 's32[1]{0}', space=sflag, size = 0x4, scoped, tag = 'scoped memory for tpu_custom_call.1']
    #allocation6 [shape = 'u8[8192]{0}', space=vmem, size = 0x2000, scoped, tag = 'input window, operand 1, single buffered']
    #allocation7 [shape = 's32[1]{0}', space=sflag, size = 0x4, scoped, tag = 'scoped memory for tpu_custom_call.1']
    #allocation8 [shape = 'u8[32768]{0}', space=vmem, size = 0x8000, scoped, tag = 'input window, operand 2, single buffered']
    #allocation9 [shape = 'u8[32768]{0}', space=vmem, size = 0x8000, scoped, tag = 'input window, operand 3, single buffered']
    #allocation10 [shape = 's32[1]{0}', space=sflag, size = 0x4, scoped, tag = 'scoped memory for tpu_custom_call.1']
    #allocation11 [shape = 'u8[16384]{0}', space=vmem, size = 0x4000, scoped, tag = 'input window, operand 4, single buffered']
    #allocation12 [shape = 'u8[16384]{0}', space=vmem, size = 0x4000, scoped, tag = 'output window, operand 0, single buffered']
    %10 = vsyncpa [#allocation4], 0
    %11 = vsyncpa [#allocation7], 0
    %12 = vsyncpa [#allocation10], 0
    %13 = vsyncpa [#allocation5], 0
    // Predicated region
    $region2: #{tpu_custom_call.1} parent=1 // pred_check
      _
    $region3: #{tpu_custom_call.1} parent=1 // pred_check_branch
      %15 = sbr.rel (0) target = $region5
    $region4: #{tpu_custom_call.1} parent=1 // pred_region
      %s17 = ssub.s32 256, 256
      %18 = vsyncadd [#allocation4], %s17
      %s19 = sshll.u32 [#allocation3], 4
      %s20 = int_to_ptr.vmem [resolvable:$true] %s19
      %25 = dma.hbm_to_vmem [thread:$0]  %s0, 256, %s20, [#allocation4], 64, 64, 4
    $region5: #{tpu_custom_call.1} parent=1 // pred_fallthru
      _
    // Predicated region
    $region6: #{tpu_custom_call.1} parent=1 // pred_check
      _
    $region7: #{tpu_custom_call.1} parent=1 // pred_check_branch
      %27 = sbr.rel (0) target = $region9
    $region8: #{tpu_custom_call.1} parent=1 // pred_region
      %s29 = ssub.s32 256, 256
      %30 = vsyncadd [#allocation7], %s29
      %s31 = sshll.u32 [#allocation6], 4
      %s32 = int_to_ptr.vmem [resolvable:$true] %s31
      %37 = dma.hbm_to_vmem [thread:$0]  %s1, 256, %s32, [#allocation7], 64, 64, 4
    $region9: #{tpu_custom_call.1} parent=1 // pred_fallthru
      _
    // Predicated region
    $region10: #{tpu_custom_call.1} parent=1 // pred_check
      _
    $region11: #{tpu_custom_call.1} parent=1 // pred_check_branch
      %39 = sbr.rel (0) target = $region13
    $region12: #{tpu_custom_call.1} parent=1 // pred_region
      %s41 = ssub.s32 1024, 1024
      %42 = vsyncadd [#allocation7], %s41
      %s43 = sshll.u32 [#allocation8], 4
      %s44 = int_to_ptr.vmem [resolvable:$true] %s43
      %49 = dma.hbm_to_vmem [thread:$0]  %s2, 1024, %s44, [#allocation7], 64, 64, 4
    $region13: #{tpu_custom_call.1} parent=1 // pred_fallthru
      _
    // Predicated region
    $region14: #{tpu_custom_call.1} parent=1 // pred_check
      _
    $region15: #{tpu_custom_call.1} parent=1 // pred_check_branch
      %51 = sbr.rel (0) target = $region17
    $region16: #{tpu_custom_call.1} parent=1 // pred_region
      %s53 = ssub.s32 1024, 1024
      %54 = vsyncadd [#allocation10], %s53
      %s55 = sshll.u32 [#allocation9], 4
      %s56 = int_to_ptr.vmem [resolvable:$true] %s55
      %61 = dma.hbm_to_vmem [thread:$0]  %s3, 1024, %s56, [#allocation10], 64, 64, 4
    $region17: #{tpu_custom_call.1} parent=1 // pred_fallthru
      _
    // Predicated region
    $region18: #{tpu_custom_call.1} parent=1 // pred_check
      _
    $region19: #{tpu_custom_call.1} parent=1 // pred_check_branch
      %63 = sbr.rel (0) target = $region21
    $region20: #{tpu_custom_call.1} parent=1 // pred_region
      %s65 = ssub.s32 512, 512
      %66 = vsyncadd [#allocation10], %s65
      %s67 = sshll.u32 [#allocation11], 4
      %s68 = int_to_ptr.vmem [resolvable:$true] %s67
      %73 = dma.hbm_to_vmem [thread:$0]  %s4, 512, %s68, [#allocation10], 128, 128, 8
    $region21: #{tpu_custom_call.1} parent=1 // pred_fallthru
      _
    // Predicated region
    $region22: #{tpu_custom_call.1} parent=1 // pred_check
      _
    $region23: #{tpu_custom_call.1} parent=1 // pred_check_branch
      %75 = sbr.rel (0) target = $region25
    $region24: #{tpu_custom_call.1} parent=1 // pred_region
      %76 = dma.done [#allocation4], 256
    $region25: #{tpu_custom_call.1} parent=1 // pred_fallthru
      _
    // Predicated region
    $region26: #{tpu_custom_call.1} parent=1 // pred_check
      _
    $region27: #{tpu_custom_call.1} parent=1 // pred_check_branch
      %78 = sbr.rel (0) target = $region29
    $region28: #{tpu_custom_call.1} parent=1 // pred_region
      %79 = dma.done [#allocation7], 256
    $region29: #{tpu_custom_call.1} parent=1 // pred_fallthru
      _
    // Predicated region
    $region30: #{tpu_custom_call.1} parent=1 // pred_check
      _
    $region31: #{tpu_custom_call.1} parent=1 // pred_check_branch
      %81 = sbr.rel (0) target = $region33
    $region32: #{tpu_custom_call.1} parent=1 // pred_region
      %82 = dma.done [#allocation7], 1024
    $region33: #{tpu_custom_call.1} parent=1 // pred_fallthru
      _
    // Predicated region
    $region34: #{tpu_custom_call.1} parent=1 // pred_check
      _
    $region35: #{tpu_custom_call.1} parent=1 // pred_check_branch
      %84 = sbr.rel (0) target = $region37
    $region36: #{tpu_custom_call.1} parent=1 // pred_region
      %85 = dma.done [#allocation10], 1024
    $region37: #{tpu_custom_call.1} parent=1 // pred_fallthru
      _
    // Predicated region
    $region38: #{tpu_custom_call.1} parent=1 // pred_check
      _
    $region39: #{tpu_custom_call.1} parent=1 // pred_check_branch
      %87 = sbr.rel (0) target = $region41
    $region40: #{tpu_custom_call.1} parent=1 // pred_region
      %88 = dma.done [#allocation10], 512
    $region41: #{tpu_custom_call.1} parent=1 // pred_fallthru
      _
    %p90 = scmp.eq.s32.totalorder 0, 0
    // Predicated region
    $region42: #{tpu_custom_call.1} parent=1 // pred_check
      %p91 = pneg %p90
    $region43: #{tpu_custom_call.1} parent=1 // pred_check_branch
      %93 = sbr.rel (%p91) target = $region45
    $region44: #{tpu_custom_call.1} parent=1 // pred_region
      %94 = vst [vmem:[#allocation2] sm:$0xff] 0.0
      %95 = vst [vmem:[#allocation2 + $0x8] sm:$0xff] 0.0
      %96 = vst [vmem:[#allocation2 + $0x10] sm:$0xff] 0.0
      %97 = vst [vmem:[#allocation2 + $0x18] sm:$0xff] 0.0
    $region45: #{tpu_custom_call.1} parent=1 // pred_fallthru
      _
    %v98 = vld [vmem:[#allocation2] sm:$0xff]
    %v99 = vld [vmem:[#allocation2 + $0x8] sm:$0xff]
    %v100 = vld [vmem:[#allocation2 + $0x10] sm:$0xff]
    %v101 = vld [vmem:[#allocation2 + $0x18] sm:$0xff]
    %v102 = vld [vmem:[#allocation3] sm:$0xf]
    %v103 = vld [vmem:[#allocation3 + $0x4] sm:$0xf]
    %v104 = vld [vmem:[#allocation3 + $0x8] sm:$0xf]
    %v105 = vld [vmem:[#allocation3 + $0xc] sm:$0xf]
    %v106 = vld [vmem:[#allocation8] sm:$0xf]
    %v107 = vld [vmem:[#allocation8 + $0x4] sm:$0xf]
    %v108 = vld [vmem:[#allocation8 + $0x8] sm:$0xf]
    %v109 = vld [vmem:[#allocation8 + $0xc] sm:$0xf]
    %v110 = vld [vmem:[#allocation8 + $0x10] sm:$0xf]
    %v111 = vld [vmem:[#allocation8 + $0x14] sm:$0xf]
    %v112 = vld [vmem:[#allocation8 + $0x18] sm:$0xf]
    %v113 = vld [vmem:[#allocation8 + $0x1c] sm:$0xf]
    %v114 = vld [vmem:[#allocation8 + $0x20] sm:$0xf]
    %v115 = vld [vmem:[#allocation8 + $0x24] sm:$0xf]
    %v116 = vld [vmem:[#allocation8 + $0x28] sm:$0xf]
    %v117 = vld [vmem:[#allocation8 + $0x2c] sm:$0xf]
    %v118 = vld [vmem:[#allocation8 + $0x30] sm:$0xf]
    %v119 = vld [vmem:[#allocation8 + $0x34] sm:$0xf]
    %v120 = vld [vmem:[#allocation8 + $0x38] sm:$0xf]
    %v121 = vld [vmem:[#allocation8 + $0x3c] sm:$0xf]
    %v126 = vunpack.c.l.b16 %v102
    %v127 = vunpack.c.l.b16 %v103
    %v128 = vunpack.c.l.b16 %v104
    %v129 = vunpack.c.l.b16 %v105
    %v130 = vpack.c.b16 %v127, %v126
    %v131 = vpack.c.b16 %v129, %v128
    %v150 = vunpack.c.l.b16 %v106
    %v151 = vunpack.c.l.b16 %v107
    %v152 = vunpack.c.l.b16 %v108
    %v153 = vunpack.c.l.b16 %v109
    %v154 = vunpack.c.l.b16 %v110
    %v155 = vunpack.c.l.b16 %v111
    %v156 = vunpack.c.l.b16 %v112
    %v157 = vunpack.c.l.b16 %v113
    %v158 = vunpack.c.l.b16 %v114
    %v159 = vunpack.c.l.b16 %v115
    %v160 = vunpack.c.l.b16 %v116
    %v161 = vunpack.c.l.b16 %v117
    %v162 = vunpack.c.l.b16 %v118
    %v163 = vunpack.c.l.b16 %v119
    %v164 = vunpack.c.l.b16 %v120
    %v165 = vunpack.c.l.b16 %v121
    %v166 = vpack.c.b16 %v151, %v150
    %v167 = vpack.c.b16 %v153, %v152
    %v168 = vpack.c.b16 %v155, %v154
    %v169 = vpack.c.b16 %v157, %v156
    %v170 = vpack.c.b16 %v159, %v158
    %v171 = vpack.c.b16 %v161, %v160
    %v172 = vpack.c.b16 %v163, %v162
    %v173 = vpack.c.b16 %v165, %v164
    %182 = vmatprep.subr.bf16.mxu0 0
    %183 = vmatpush1.bf16.msra.mxu0 %v166
    %184 = vmatprep.subr.bf16.mxu0 0
    %185 = vmatpush1.bf16.msra.mxu0 %v167
    %186 = vmatprep.subr.bf16.mxu0 0
    %187 = vmatpush1.bf16.msra.mxu0 %v168
    %188 = vmatprep.subr.bf16.mxu0 0
    %189 = vmatpush1.bf16.msra.mxu0 %v169
    %190 = vmatprep.subr.bf16.mxu0 0
    %191 = vmatpush1.bf16.msra.mxu0 %v170
    %192 = vmatprep.subr.bf16.mxu0 0
    %193 = vmatpush1.bf16.msra.mxu0 %v171
    %194 = vmatprep.subr.bf16.mxu0 0
    %195 = vmatpush1.bf16.msra.mxu0 %v172
    %196 = vmatprep.subr.bf16.mxu0 0
    %197 = vmatpush1.bf16.msra.mxu0 %v173
    %198 = vmatprep.subr.bf16.mxu0 0
    %199 = vmatpush1.bf16.msra.mxu0 0
    %200 = vmatprep.subr.bf16.mxu0 0
    %201 = vmatpush1.bf16.msra.mxu0 0
    %202 = vmatprep.subr.bf16.mxu0 0
    %203 = vmatpush1.bf16.msra.mxu0 0
    %204 = vmatprep.subr.bf16.mxu0 0
    %205 = vmatpush1.bf16.msra.mxu0 0
    %206 = vmatprep.subr.bf16.mxu0 0
    %207 = vmatpush1.bf16.msra.mxu0 0
    %208 = vmatprep.subr.bf16.mxu0 0
    %209 = vmatpush1.bf16.msra.mxu0 0
    %210 = vmatprep.subr.bf16.mxu0 0
    %211 = vmatpush1.bf16.msra.mxu0 0
    %212 = vmatprep.subr.bf16.mxu0 0
    %213 = vmatpush1.bf16.msra.mxu0 0
    %214 = vmatprep.mubr.bf16.mxu0 0
    %215 = vmatmul.mubr.bf16.gmra.mrb[0].mxu0 %v130
    %v216 = vpop.f32.mrb[0].mxu0
    %v217 = vadd.f32 0.0, %v216
    %v218 = vpop.f32.mrb[0].mxu0
    %v219 = vpop.f32.mrb[0].mxu0
    %v220 = vadd.f32 0.0, %v219
    %v221 = vpop.f32.mrb[0].mxu0
    %222 = vmatprep.mubr.bf16.mxu0 0
    %223 = vmatmul.mubr.bf16.gmra.mrb[0].mxu0 %v131
    %v224 = vpop.f32.mrb[0].mxu0
    %v225 = vadd.f32 0.0, %v224
    %v226 = vpop.f32.mrb[0].mxu0
    %v227 = vpop.f32.mrb[0].mxu0
    %v228 = vadd.f32 0.0, %v227
    %v229 = vpop.f32.mrb[0].mxu0
    %230 = vdwg.mxu0
    %v231 = vadd.f32 %v98, %v217
    %v232 = vadd.f32 %v99, %v220
    %v233 = vadd.f32 %v100, %v225
    %v234 = vadd.f32 %v101, %v228
    %235 = vst [vmem:[#allocation2] sm:$0xff] %v231
    %236 = vst [vmem:[#allocation2 + $0x8] sm:$0xff] %v232
    %237 = vst [vmem:[#allocation2 + $0x10] sm:$0xff] %v233
    %238 = vst [vmem:[#allocation2 + $0x18] sm:$0xff] %v234
    %v239 = vld [vmem:[#allocation2] sm:$0xff]
    %v240 = vld [vmem:[#allocation2 + $0x8] sm:$0xff]
    %v241 = vld [vmem:[#allocation2 + $0x10] sm:$0xff]
    %v242 = vld [vmem:[#allocation2 + $0x18] sm:$0xff]
    %v243 = vld [vmem:[#allocation6] sm:$0xf]
    %v244 = vld [vmem:[#allocation6 + $0x4] sm:$0xf]
    %v245 = vld [vmem:[#allocation6 + $0x8] sm:$0xf]
    %v246 = vld [vmem:[#allocation6 + $0xc] sm:$0xf]
    %v247 = vld [vmem:[#allocation9] sm:$0xf]
    %v248 = vld [vmem:[#allocation9 + $0x4] sm:$0xf]
    %v249 = vld [vmem:[#allocation9 + $0x8] sm:$0xf]
    %v250 = vld [vmem:[#allocation9 + $0xc] sm:$0xf]
    %v251 = vld [vmem:[#allocation9 + $0x10] sm:$0xf]
    %v252 = vld [vmem:[#allocation9 + $0x14] sm:$0xf]
    %v253 = vld [vmem:[#allocation9 + $0x18] sm:$0xf]
    %v254 = vld [vmem:[#allocation9 + $0x1c] sm:$0xf]
    %v255 = vld [vmem:[#allocation9 + $0x20] sm:$0xf]
    %v256 = vld [vmem:[#allocation9 + $0x24] sm:$0xf]
    %v257 = vld [vmem:[#allocation9 + $0x28] sm:$0xf]
    %v258 = vld [vmem:[#allocation9 + $0x2c] sm:$0xf]
    %v259 = vld [vmem:[#allocation9 + $0x30] sm:$0xf]
    %v260 = vld [vmem:[#allocation9 + $0x34] sm:$0xf]
    %v261 = vld [vmem:[#allocation9 + $0x38] sm:$0xf]
    %v262 = vld [vmem:[#allocation9 + $0x3c] sm:$0xf]
    %v267 = vunpack.c.l.b16 %v243
    %v268 = vunpack.c.l.b16 %v244
    %v269 = vunpack.c.l.b16 %v245
    %v270 = vunpack.c.l.b16 %v246
    %v271 = vpack.c.b16 %v268, %v267
    %v272 = vpack.c.b16 %v270, %v269
    %v291 = vunpack.c.l.b16 %v247
    %v292 = vunpack.c.l.b16 %v248
    %v293 = vunpack.c.l.b16 %v249
    %v294 = vunpack.c.l.b16 %v250
    %v295 = vunpack.c.l.b16 %v251
    %v296 = vunpack.c.l.b16 %v252
    %v297 = vunpack.c.l.b16 %v253
    %v298 = vunpack.c.l.b16 %v254
    %v299 = vunpack.c.l.b16 %v255
    %v300 = vunpack.c.l.b16 %v256
    %v301 = vunpack.c.l.b16 %v257
    %v302 = vunpack.c.l.b16 %v258
    %v303 = vunpack.c.l.b16 %v259
    %v304 = vunpack.c.l.b16 %v260
    %v305 = vunpack.c.l.b16 %v261
    %v306 = vunpack.c.l.b16 %v262
    %v307 = vpack.c.b16 %v292, %v291
    %v308 = vpack.c.b16 %v294, %v293
    %v309 = vpack.c.b16 %v296, %v295
    %v310 = vpack.c.b16 %v298, %v297
    %v311 = vpack.c.b16 %v300, %v299
    %v312 = vpack.c.b16 %v302, %v301
    %v313 = vpack.c.b16 %v304, %v303
    %v314 = vpack.c.b16 %v306, %v305
    %323 = vmatprep.subr.bf16.mxu0 0
    %324 = vmatpush1.bf16.msra.mxu0 %v307
    %325 = vmatprep.subr.bf16.mxu0 0
    %326 = vmatpush1.bf16.msra.mxu0 %v308
    %327 = vmatprep.subr.bf16.mxu0 0
    %328 = vmatpush1.bf16.msra.mxu0 %v309
    %329 = vmatprep.subr.bf16.mxu0 0
    %330 = vmatpush1.bf16.msra.mxu0 %v310
    %331 = vmatprep.subr.bf16.mxu0 0
    %332 = vmatpush1.bf16.msra.mxu0 %v311
    %333 = vmatprep.subr.bf16.mxu0 0
    %334 = vmatpush1.bf16.msra.mxu0 %v312
    %335 = vmatprep.subr.bf16.mxu0 0
    %336 = vmatpush1.bf16.msra.mxu0 %v313
    %337 = vmatprep.subr.bf16.mxu0 0
    %338 = vmatpush1.bf16.msra.mxu0 %v314
    %339 = vmatprep.subr.bf16.mxu0 0
    %340 = vmatpush1.bf16.msra.mxu0 0
    %341 = vmatprep.subr.bf16.mxu0 0
    %342 = vmatpush1.bf16.msra.mxu0 0
    %343 = vmatprep.subr.bf16.mxu0 0
    %344 = vmatpush1.bf16.msra.mxu0 0
    %345 = vmatprep.subr.bf16.mxu0 0
    %346 = vmatpush1.bf16.msra.mxu0 0
    %347 = vmatprep.subr.bf16.mxu0 0
    %348 = vmatpush1.bf16.msra.mxu0 0
    %349 = vmatprep.subr.bf16.mxu0 0
    %350 = vmatpush1.bf16.msra.mxu0 0
    %351 = vmatprep.subr.bf16.mxu0 0
    %352 = vmatpush1.bf16.msra.mxu0 0
    %353 = vmatprep.subr.bf16.mxu0 0
    %354 = vmatpush1.bf16.msra.mxu0 0
    %355 = vmatprep.mubr.bf16.mxu0 0
    %356 = vmatmul.mubr.bf16.gmra.mrb[0].mxu0 %v271
    %v357 = vpop.f32.mrb[0].mxu0
    %v358 = vadd.f32 0.0, %v357
    %v359 = vpop.f32.mrb[0].mxu0
    %v360 = vpop.f32.mrb[0].mxu0
    %v361 = vadd.f32 0.0, %v360
    %v362 = vpop.f32.mrb[0].mxu0
    %363 = vmatprep.mubr.bf16.mxu0 0
    %364 = vmatmul.mubr.bf16.gmra.mrb[0].mxu0 %v272
    %v365 = vpop.f32.mrb[0].mxu0
    %v366 = vadd.f32 0.0, %v365
    %v367 = vpop.f32.mrb[0].mxu0
    %v368 = vpop.f32.mrb[0].mxu0
    %v369 = vadd.f32 0.0, %v368
    %v370 = vpop.f32.mrb[0].mxu0
    %371 = vdwg.mxu0
    %v372 = vadd.f32 %v239, %v358
    %v373 = vadd.f32 %v240, %v361
    %v374 = vadd.f32 %v241, %v366
    %v375 = vadd.f32 %v242, %v369
    %376 = vst [vmem:[#allocation2] sm:$0xff] %v372
    %377 = vst [vmem:[#allocation2 + $0x8] sm:$0xff] %v373
    %378 = vst [vmem:[#allocation2 + $0x10] sm:$0xff] %v374
    %379 = vst [vmem:[#allocation2 + $0x18] sm:$0xff] %v375
    // Predicated region
    $region46: #{tpu_custom_call.1} parent=1 // pred_check
      %p380 = pneg %p90
    $region47: #{tpu_custom_call.1} parent=1 // pred_check_branch
      %382 = sbr.rel (%p380) target = $region49
    $region48: #{tpu_custom_call.1} parent=1 // pred_region
      %v383 = vld [vmem:[#allocation2] sm:$0xff]
      %v384 = vld [vmem:[#allocation2 + $0x8] sm:$0xff]
      %v385 = vld [vmem:[#allocation2 + $0x10] sm:$0xff]
      %v386 = vld [vmem:[#allocation2 + $0x18] sm:$0xff]
      %v387 = vld [vmem:[#allocation11] sm:$0xff]
      %v388 = vld [vmem:[#allocation11 + $0x8] sm:$0xff]
      %v389 = vld [vmem:[#allocation11 + $0x10] sm:$0xff]
      %v390 = vld [vmem:[#allocation11 + $0x18] sm:$0xff]
      %v391 = vadd.f32 %v383, %v387
      %v392 = vadd.f32 %v384, %v388
      %v393 = vadd.f32 %v385, %v389
      %v394 = vadd.f32 %v386, %v390
      %v395 = vxor.u32 %v391, 2147483648
      %v396 = vxor.u32 %v392, 2147483648
      %v397 = vxor.u32 %v393, 2147483648
      %v398 = vxor.u32 %v394, 2147483648
      %v399 = vmul.f32 %v395, 1.442695
      %v400 = vpow.pop %v399
      %v401 = vmul.f32 %v396, 1.442695
      %v402 = vpow.pop %v401
      %v403 = vmul.f32 %v397, 1.442695
      %v404 = vpow.pop %v403
      %v405 = vmul.f32 %v398, 1.442695
      %v406 = vpow.pop %v405
      %v407 = vadd.f32 %v400, 1.0
      %v408 = vadd.f32 %v402, 1.0
      %v409 = vadd.f32 %v404, 1.0
      %v410 = vadd.f32 %v406, 1.0
      %v411 = vrcp.pop %v407
      %v412 = vmul.f32 1.0, %v411
      %v413 = vrcp.pop %v408
      %v414 = vmul.f32 1.0, %v413
      %v415 = vrcp.pop %v409
      %v416 = vmul.f32 1.0, %v415
      %v417 = vrcp.pop %v410
      %v418 = vmul.f32 1.0, %v417
      %419 = vst [vmem:[#allocation12] sm:$0xff] %v412
      %420 = vst [vmem:[#allocation12 + $0x8] sm:$0xff] %v414
      %421 = vst [vmem:[#allocation12 + $0x10] sm:$0xff] %v416
      %422 = vst [vmem:[#allocation12 + $0x18] sm:$0xff] %v418
    $region49: #{tpu_custom_call.1} parent=1 // pred_fallthru
      _
    // Predicated region
    $region50: #{tpu_custom_call.1} parent=1 // pred_check
      _
    $region51: #{tpu_custom_call.1} parent=1 // pred_check_branch
      %424 = sbr.rel (0) target = $region53
    $region52: #{tpu_custom_call.1} parent=1 // pred_region
      %s426 = ssub.s32 512, 512
      %427 = vsyncadd [#allocation5], %s426
      %s428 = sshll.u32 [#allocation12], 4
      %s429 = int_to_ptr.vmem [resolvable:$true] %s428
      %434 = dma.vmem_to_hbm [thread:$0]  %s429, 512, %s5, [#allocation5], 128, 128, 8
    $region53: #{tpu_custom_call.1} parent=1 // pred_fallthru
      _
    // Predicated region
    $region54: #{tpu_custom_call.1} parent=1 // pred_check
      _
    $region55: #{tpu_custom_call.1} parent=1 // pred_check_branch
      %436 = sbr.rel (0) target = $region57
    $region56: #{tpu_custom_call.1} parent=1 // pred_region
      %437 = dma.done [#allocation5], 512
    $region57: #{tpu_custom_call.1} parent=1 // pred_fallthru
      _
    %438 = vsyncpa [#allocation4], 1
    %439 = vsyncpa [#allocation7], 1
    %440 = vsyncpa [#allocation10], 1
    %441 = vsyncpa [#allocation5], 1

</llo_original>
